<compile_context>
chip_gen: v7x
topology: tpu7x:2x2x1
jax: 0.10.0
libtpu: 0.0.40
codegen_flags: <defaults>
</compile_context>

<pallas_src>
import functools

import jax
import jax.numpy as jnp
from jax.experimental import pallas as pl
from jax.experimental.pallas import tpu as pltpu


def _fc1_kernel(x_ref, wt_ref, b_ref, o_ref):
    # x_ref : (TN, D) tile of embedding_2
    # wt_ref: (D, D)  fc1 weight, pre-transposed to (in, out) layout in the wrapper
    # b_ref : (1, D)  fc1 bias
    # o_ref : (TN, D) tile of e2_after
    o_ref[...] = (
        jnp.dot(x_ref[...], wt_ref[...], preferred_element_type=jnp.float32)
        + b_ref[...]
    ).astype(o_ref.dtype)


def _distance_kernel(x1_ref, x2_ref, out_ref, acc_ref, *, total_p, tile_p):
    # x1_ref : (TP, D) rows of embedding_1 gathered by anchors[:, 0]
    # x2_ref : (TP, D) rows of e2_after   gathered by anchors[:, 1]
    # out_ref: (1, 1)  SMEM scalar: final mean distance
    # acc_ref: (TP, 1) VMEM vector accumulator of per-row distances
    step = pl.program_id(0)

    @pl.when(step == 0)
    def _init():
        acc_ref[...] = jnp.zeros_like(acc_ref)

    # torch.nn.functional.pairwise_distance(x1, x2, p=2, eps=1e-6)
    diff = x1_ref[...] - x2_ref[...] + jnp.float32(1e-6)
    dist = jnp.sqrt(jnp.sum(diff * diff, axis=-1, keepdims=True))      # (TP, 1)

    # Mask rows of the (possibly ragged) last tile that lie past the real P extent;
    # those block rows hold garbage but never reach the accumulator.
    row = step * tile_p + jax.lax.broadcasted_iota(jnp.int32, dist.shape, 0)
    acc_ref[...] += jnp.where(row < total_p, dist, jnp.float32(0.0))

    @pl.when(step == pl.num_programs(0) - 1)
    def _finalize():
        out_ref[0, 0] = jnp.sum(acc_ref[...]) * jnp.float32(1.0 / total_p)


def matching_forward(embedding_1, embedding_2, observed_anchors_p, fc1_w, fc1_b,
                     *, tile_n=512, tile_p=512):
    """Pallas implementation of Matching.forward.

    embedding_1: (N1, D) float32
    embedding_2: (N2, D) float32
    observed_anchors_p: (P, 2) int32 anchor index pairs
    fc1_w: (D, D) float32 fc1 weight (PyTorch out, in layout)
    fc1_b: (D,)   float32 fc1 bias
    returns scalar float32: mean pairwise L2 distance between anchored rows.
    """
    n2, d = embedding_2.shape

    # --- fc1 hoisted onto embedding_2 (applied once per embedding row) -----------
    # One-time weight transpose in XLA keeps the kernel on a canonical [M,K]x[K,N]
    # MXU contraction; the weight/bias stay resident in VMEM across N2 tiles.
    w_t = jnp.transpose(fc1_w)
    bias_2d = fc1_b.reshape(1, d)

    tn = n2 if n2 <= tile_n else tile_n
    e2_after = pl.pallas_call(
        _fc1_kernel,
        grid=(pl.cdiv(n2, tn),),
        in_specs=[
            pl.BlockSpec((tn, d), lambda i: (i, 0)),   # embedding_2 tile (streams over N2)
            pl.BlockSpec((d, d), lambda i: (0, 0)),    # W^T, resident across grid
            pl.BlockSpec((1, d), lambda i: (0, 0)),    # bias, resident across grid
        ],
        out_specs=pl.BlockSpec((tn, d), lambda i: (i, 0)),
        out_shape=jax.ShapeDtypeStruct((n2, d), jnp.float32),
        compiler_params=pltpu.CompilerParams(
            dimension_semantics=("parallel",),         # independent N2 tiles
        ),
        cost_estimate=pl.CostEstimate(
            flops=2 * n2 * d * d + n2 * d,
            transcendentals=0,
            bytes_accessed=(2 * n2 * d + d * d + d) * 4,
        ),
    )(embedding_2, w_t, bias_2d)

    # Anchor gather kept as XLA indexing glue (cheap at these sizes).
    # TODO(synk): for production-sized P, fuse the gather into the distance kernel
    # (keep embedding_1 / e2_after resident in VMEM and scalar-prefetch the anchors).
    x1 = embedding_1[observed_anchors_p[:, 0]]        # (P, D)
    x2 = e2_after[observed_anchors_p[:, 1]]           # (P, D)
    p = x1.shape[0]

    # --- streaming distance reduction over P tiles -------------------------------
    # No jnp.pad: when P <= tile_p a single full-extent block is used (one grid step);
    # otherwise the ragged last block is padded by Pallas and masked in-kernel.
    tp = p if p <= tile_p else tile_p
    num_tiles = pl.cdiv(p, tp)

    kernel = functools.partial(_distance_kernel, total_p=p, tile_p=tp)
    out = pl.pallas_call(
        kernel,
        grid=(num_tiles,),
        in_specs=[
            pl.BlockSpec((tp, d), lambda i: (i, 0)),   # x1 tile (streams over P)
            pl.BlockSpec((tp, d), lambda i: (i, 0)),   # x2 tile (streams over P)
        ],
        out_specs=pl.BlockSpec(memory_space=pltpu.MemorySpace.SMEM),  # scalar mean
        out_shape=jax.ShapeDtypeStruct((1, 1), jnp.float32),
        scratch_shapes=[pltpu.VMEM((tp, 1), jnp.float32)],            # vector accumulator
        compiler_params=pltpu.CompilerParams(
            dimension_semantics=("arbitrary",),        # sequential reduction over P tiles
        ),
        cost_estimate=pl.CostEstimate(
            flops=4 * p * d,
            transcendentals=p,
            bytes_accessed=2 * p * d * 4 + 4,
        ),
    )(x1, x2)
    # TODO(synk): on v7x, split the P axis across the two TensorCores (leading size-2
    # "parallel" grid axis emitting per-core partial sums, reduced in the wrapper).

    return out[0, 0]


def _reference_forward(embedding_1, embedding_2, anchors, fc1_w, fc1_b):
    # Pure-JAX reference mirroring the PyTorch module exactly.
    e2_after = jnp.dot(embedding_2, fc1_w.T,
                       precision=jax.lax.Precision.HIGHEST) + fc1_b
    x1 = embedding_1[anchors[:, 0]]
    x2 = e2_after[anchors[:, 1]]
    dist = jnp.sqrt(jnp.sum((x1 - x2 + 1e-6) ** 2, axis=-1))
    return jnp.mean(dist)


if __name__ == "__main__":
    key = jax.random.PRNGKey(0)
    k_e1, k_e2, k_w1, k_b1, k_anchor = jax.random.split(key, 5)

    # Small but vreg/MXU-friendly shapes: lane-dense D (multiple of 128) and a P that
    # exercises the single-step full-extent tile path (200 anchors -> 1 tile of 200).
    N1, N2, D, P = 64, 64, 128, 200

    embedding_1 = jax.random.normal(k_e1, (N1, D), dtype=jnp.float32)
    embedding_2 = jax.random.normal(k_e2, (N2, D), dtype=jnp.float32)

    # nn.Linear default init: U(-1/sqrt(D), 1/sqrt(D)).  (fc2 is unused in forward.)
    bound = float(D) ** -0.5
    fc1_w = jax.random.uniform(k_w1, (D, D), jnp.float32, -bound, bound)
    fc1_b = jax.random.uniform(k_b1, (D,), jnp.float32, -bound, bound)

    anchors_0 = jax.random.randint(k_anchor, (P,), 0, N1)
    anchors_1 = jax.random.randint(jax.random.fold_in(k_anchor, 1), (P,), 0, N2)
    observed_anchors_p = jnp.stack([anchors_0, anchors_1], axis=1).astype(jnp.int32)

    dis_p = matching_forward(embedding_1, embedding_2, observed_anchors_p, fc1_w, fc1_b)
    dis_p = jax.block_until_ready(dis_p)

    ref = _reference_forward(embedding_1, embedding_2, observed_anchors_p, fc1_w, fc1_b)
    assert jnp.allclose(dis_p, ref, rtol=1e-4, atol=1e-4), (dis_p, ref)

    print("KERNEL_OK")
</pallas_src>

<mosaic_0001>
module attributes {stable_mosaic.version = 11 : i64} {
  func.func @_fc1_kernel(%arg0: i32, %arg1: memref<64x128xf32, #tpu.memory_space<vmem>>, %arg2: memref<128x128xf32, #tpu.memory_space<vmem>>, %arg3: memref<1x128xf32, #tpu.memory_space<vmem>>, %arg4: memref<64x128xf32, #tpu.memory_space<vmem>>) attributes {dimension_semantics = [#tpu.dimension_semantics<parallel>], iteration_bounds = array<i64: 1>, scalar_prefetch = 0 : i64, scratch_operands = 0 : i64, tpu.core_type = #tpu.core_type<tc>, window_params = [{transform_indices = @transform_0, window_bounds = array<i64: 64, 128>}, {pipeline_mode = #tpu.pipeline_mode<synchronous>, transform_indices = @transform_1, window_bounds = array<i64: 128, 128>}, {pipeline_mode = #tpu.pipeline_mode<synchronous>, transform_indices = @transform_2, window_bounds = array<i64: 1, 128>}, {transform_indices = @transform_3, window_bounds = array<i64: 64, 128>}]} {
    %c0 = arith.constant 0 : index
    %c0_0 = arith.constant 0 : index
    %0 = vector.load %arg1[%c0, %c0_0] : memref<64x128xf32, #tpu.memory_space<vmem>>, vector<64x128xf32>
    %c0_1 = arith.constant 0 : index
    %c0_2 = arith.constant 0 : index
    %1 = vector.load %arg2[%c0_1, %c0_2] : memref<128x128xf32, #tpu.memory_space<vmem>>, vector<128x128xf32>
    %cst = arith.constant dense<0.000000e+00> : vector<64x128xf32>
    %2 = tpu.matmul %0, %1, %cst {dimension_numbers = #tpu.dot_dimension_numbers<[1], [0], [0], [1], [0, 0, 1, 1], [], []>} : vector<64x128xf32>, vector<128x128xf32>, vector<64x128xf32> -> vector<64x128xf32>
    %c0_3 = arith.constant 0 : index
    %c0_4 = arith.constant 0 : index
    %3 = vector.load %arg3[%c0_3, %c0_4] : memref<1x128xf32, #tpu.memory_space<vmem>>, vector<1x128xf32>
    %4 = vector.broadcast %3 : vector<1x128xf32> to vector<64x128xf32>
    %5 = arith.addf %2, %4 : vector<64x128xf32>
    %c0_5 = arith.constant 0 : index
    %c0_6 = arith.constant 0 : index
    %6 = vector.load %arg4[%c0_5, %c0_6] : memref<64x128xf32, #tpu.memory_space<vmem>>, vector<64x128xf32>
    tpu.vector_store %arg4[%c0_5, %c0_6], %5 {strides = array<i32>} : memref<64x128xf32, #tpu.memory_space<vmem>>, vector<64x128xf32>,
    return
  }
  func.func @transform_0(%arg0: i32) -> (i32, i32) {
    %c0_i32 = arith.constant 0 : i32
    %c0_i32_0 = arith.constant 0 : i32
    return %arg0, %c0_i32 : i32, i32
  }
  func.func @transform_1(%arg0: i32) -> (i32, i32) {
    %c0_i32 = arith.constant 0 : i32
    %c0_i32_0 = arith.constant 0 : i32
    %c0_i32_1 = arith.constant 0 : i32
    return %c0_i32, %c0_i32_0 : i32, i32
  }
  func.func @transform_2(%arg0: i32) -> (i32, i32) {
    %c0_i32 = arith.constant 0 : i32
    %c0_i32_0 = arith.constant 0 : i32
    %c0_i32_1 = arith.constant 0 : i32
    return %c0_i32, %c0_i32_0 : i32, i32
  }
  func.func @transform_3(%arg0: i32) -> (i32, i32) {
    %c0_i32 = arith.constant 0 : i32
    %c0_i32_0 = arith.constant 0 : i32
    return %arg0, %c0_i32 : i32, i32
  }
}

</mosaic_0001>

<llo_original>
// kernel: tpu_custom_call.1
$region0: #{tpu_custom_call.1}
  #allocation0 [shape = 'u32[]', space=smem, size = 0x4, offset = 0x4, fixed_abs, tag = 'smem constant byte address 0x4 - core index']
  #allocation1 [shape = 'u32[144,128]{1,0:T(1,128)}', space=vmem, size = 0x12000, scoped, tag = 'internal scratch']
  %s0 = inlined_call_operand.hbm [shape: f32[64,128], index: 0, kind: input, shape index: {}]
  %s1 = inlined_call_operand.hbm [shape: f32[128,128], index: 1, kind: input, shape index: {}]
  %s2 = inlined_call_operand.vmem [shape: f32[1,128], index: 2, kind: input, shape index: {}]
  %s3 = inlined_call_operand.hbm [shape: f32[64,128], index: 3, kind: output, shape index: {}]
  %s4 = sld [smem:[#allocation0]]
  $region30: #{tpu_custom_call.1} parent=0
    _
  %s6 = ssub.s32 1, %s4
  %s7 = scalar_select 0, %s6, %s4
  $region1: #{tpu_custom_call.1} parent=0
    #allocation2 [shape = 'u8[32768]{0}', space=vmem, size = 0x8000, scoped, tag = 'input window, operand 0, single buffered']
    #allocation3 [shape = 's32[1]{0}', space=sflag, size = 0x4, scoped, tag = 'scoped memory for tpu_custom_call.1']
    #allocation4 [shape = 's32[1]{0}', space=sflag, size = 0x4, scoped, tag = 'scoped memory for tpu_custom_call.1']
    #allocation5 [shape = 'u8[65536]{0}', space=vmem, size = 0x10000, scoped, tag = 'input window, operand 1, single buffered']
    #allocation6 [shape = 's32[1]{0}', space=sflag, size = 0x4, scoped, tag = 'scoped memory for tpu_custom_call.1']
    #allocation7 [shape = 'u8[32768]{0}', space=vmem, size = 0x8000, scoped, tag = 'output window, operand 0, single buffered']
    %8 = vsyncpa [#allocation3], 0
    %9 = vsyncpa [#allocation6], 0
    %10 = vsyncpa [#allocation4], 0
    // Predicated region
    $region2: #{tpu_custom_call.1} parent=1 // pred_check
      _
    $region3: #{tpu_custom_call.1} parent=1 // pred_check_branch
      %12 = sbr.rel (0) target = $region5
    $region4: #{tpu_custom_call.1} parent=1 // pred_region
      %s14 = ssub.s32 1024, 1024
      %15 = vsyncadd [#allocation3], %s14
      %s16 = sshll.u32 [#allocation2], 4
      %s17 = int_to_ptr.vmem [resolvable:$true] %s16
      %22 = dma.hbm_to_vmem [thread:$0]  %s0, 1024, %s17, [#allocation3], 128, 128, 8
    $region5: #{tpu_custom_call.1} parent=1 // pred_fallthru
      _
    // Predicated region
    $region6: #{tpu_custom_call.1} parent=1 // pred_check
      _
    $region7: #{tpu_custom_call.1} parent=1 // pred_check_branch
      %24 = sbr.rel (0) target = $region9
    $region8: #{tpu_custom_call.1} parent=1 // pred_region
      %s26 = ssub.s32 2048, 2048
      %27 = vsyncadd [#allocation6], %s26
      %s28 = sshll.u32 [#allocation5], 4
      %s29 = int_to_ptr.vmem [resolvable:$true] %s28
      %34 = dma.hbm_to_vmem [thread:$0]  %s1, 2048, %s29, [#allocation6], 128, 128, 8
    $region9: #{tpu_custom_call.1} parent=1 // pred_fallthru
      _
    // Predicated region
    $region10: #{tpu_custom_call.1} parent=1 // pred_check
      _
    $region11: #{tpu_custom_call.1} parent=1 // pred_check_branch
      %36 = sbr.rel (0) target = $region13
    $region12: #{tpu_custom_call.1} parent=1 // pred_region
      _
    $region13: #{tpu_custom_call.1} parent=1 // pred_fallthru
      _
    // Predicated region
    $region14: #{tpu_custom_call.1} parent=1 // pred_check
      _
    $region15: #{tpu_custom_call.1} parent=1 // pred_check_branch
      %38 = sbr.rel (0) target = $region17
    $region16: #{tpu_custom_call.1} parent=1 // pred_region
      %39 = dma.done [#allocation3], 1024
    $region17: #{tpu_custom_call.1} parent=1 // pred_fallthru
      _
    // Predicated region
    $region18: #{tpu_custom_call.1} parent=1 // pred_check
      _
    $region19: #{tpu_custom_call.1} parent=1 // pred_check_branch
      %41 = sbr.rel (0) target = $region21
    $region20: #{tpu_custom_call.1} parent=1 // pred_region
      %42 = dma.done [#allocation6], 2048
    $region21: #{tpu_custom_call.1} parent=1 // pred_fallthru
      _
    %v43 = vld [vmem:[#allocation2] sm:$0xff]
    %v44 = vld [vmem:[#allocation2 + $0x8] sm:$0xff]
    %v45 = vld [vmem:[#allocation2 + $0x10] sm:$0xff]
    %v46 = vld [vmem:[#allocation2 + $0x18] sm:$0xff]
    %v47 = vld [vmem:[#allocation2 + $0x20] sm:$0xff]
    %v48 = vld [vmem:[#allocation2 + $0x28] sm:$0xff]
    %v49 = vld [vmem:[#allocation2 + $0x30] sm:$0xff]
    %v50 = vld [vmem:[#allocation2 + $0x38] sm:$0xff]
    %v51 = vld [vmem:[#allocation5] sm:$0xff]
    %v52 = vld [vmem:[#allocation5 + $0x8] sm:$0xff]
    %v53 = vld [vmem:[#allocation5 + $0x10] sm:$0xff]
    %v54 = vld [vmem:[#allocation5 + $0x18] sm:$0xff]
    %v55 = vld [vmem:[#allocation5 + $0x20] sm:$0xff]
    %v56 = vld [vmem:[#allocation5 + $0x28] sm:$0xff]
    %v57 = vld [vmem:[#allocation5 + $0x30] sm:$0xff]
    %v58 = vld [vmem:[#allocation5 + $0x38] sm:$0xff]
    %v59 = vld [vmem:[#allocation5 + $0x40] sm:$0xff]
    %v60 = vld [vmem:[#allocation5 + $0x48] sm:$0xff]
    %v61 = vld [vmem:[#allocation5 + $0x50] sm:$0xff]
    %v62 = vld [vmem:[#allocation5 + $0x58] sm:$0xff]
    %v63 = vld [vmem:[#allocation5 + $0x60] sm:$0xff]
    %v64 = vld [vmem:[#allocation5 + $0x68] sm:$0xff]
    %v65 = vld [vmem:[#allocation5 + $0x70] sm:$0xff]
    %v66 = vld [vmem:[#allocation5 + $0x78] sm:$0xff]
    %v67 = vld [vmem:[%s2] sm:$0x1]
    %v69 = vlaneseq
    %v70 = vshrl.u32 %v69, 7
    %v71 = vsub.s32 0, %v70
    %v72 = vrot.slane %v67, %v71
    %74 = vmatprep.subr.mxu0 0.0
    %75 = vmatpush1.msra.mxu0 %v51
    %76 = vmatprep.subr.mxu0 0.0
    %77 = vmatpush1.msra.mxu0 %v52
    %78 = vmatprep.subr.mxu0 0.0
    %79 = vmatpush1.msra.mxu0 %v53
    %80 = vmatprep.subr.mxu0 0.0
    %81 = vmatpush1.msra.mxu0 %v54
    %82 = vmatprep.subr.mxu0 0.0
    %83 = vmatpush1.msra.mxu0 %v55
    %84 = vmatprep.subr.mxu0 0.0
    %85 = vmatpush1.msra.mxu0 %v56
    %86 = vmatprep.subr.mxu0 0.0
    %87 = vmatpush1.msra.mxu0 %v57
    %88 = vmatprep.subr.mxu0 0.0
    %89 = vmatpush1.msra.mxu0 %v58
    %90 = vmatprep.subr.mxu0 0.0
    %91 = vmatpush1.msra.mxu0 %v59
    %92 = vmatprep.subr.mxu0 0.0
    %93 = vmatpush1.msra.mxu0 %v60
    %94 = vmatprep.subr.mxu0 0.0
    %95 = vmatpush1.msra.mxu0 %v61
    %96 = vmatprep.subr.mxu0 0.0
    %97 = vmatpush1.msra.mxu0 %v62
    %98 = vmatprep.subr.mxu0 0.0
    %99 = vmatpush1.msra.mxu0 %v63
    %100 = vmatprep.subr.mxu0 0.0
    %101 = vmatpush1.msra.mxu0 %v64
    %102 = vmatprep.subr.mxu0 0.0
    %103 = vmatpush1.msra.mxu0 %v65
    %104 = vmatprep.subr.mxu0 0.0
    %105 = vmatpush1.msra.mxu0 %v66
    %106 = vmatprep.subr.mxu0 0.0
    %107 = vmatpush1.msra.mxu0 0.0
    %108 = vmatprep.subr.mxu0 0.0
    %109 = vmatpush1.msra.mxu0 0.0
    %110 = vmatprep.subr.mxu0 0.0
    %111 = vmatpush1.msra.mxu0 0.0
    %112 = vmatprep.subr.mxu0 0.0
    %113 = vmatpush1.msra.mxu0 0.0
    %114 = vmatprep.subr.mxu0 0.0
    %115 = vmatpush1.msra.mxu0 0.0
    %116 = vmatprep.subr.mxu0 0.0
    %117 = vmatpush1.msra.mxu0 0.0
    %118 = vmatprep.subr.mxu0 0.0
    %119 = vmatpush1.msra.mxu0 0.0
    %120 = vmatprep.subr.mxu0 0.0
    %121 = vmatpush1.msra.mxu0 0.0
    %122 = vmatprep.subr.mxu0 0.0
    %123 = vmatpush1.msra.mxu0 0.0
    %124 = vmatprep.subr.mxu0 0.0
    %125 = vmatpush1.msra.mxu0 0.0
    %126 = vmatprep.subr.mxu0 0.0
    %127 = vmatpush1.msra.mxu0 0.0
    %128 = vmatprep.subr.mxu0 0.0
    %129 = vmatpush1.msra.mxu0 0.0
    %130 = vmatprep.subr.mxu0 0.0
    %131 = vmatpush1.msra.mxu0 0.0
    %132 = vmatprep.subr.mxu0 0.0
    %133 = vmatpush1.msra.mxu0 0.0
    %134 = vmatprep.subr.mxu0 0.0
    %135 = vmatpush1.msra.mxu0 0.0
    %136 = vmatprep.subr.mxu0 0.0
    %137 = vmatpush1.msra.mxu0 0.0
    %138 = vmatprep.mubr.f32.mxu0 0.0
    %139 = vmatmul.mubr.f32.gmra.mrb[0].mxu0 %v43
    %v140 = vpop.f32.mrb[0].mxu0
    %v141 = vadd.f32 %v72, %v140
    %v142 = vpop.f32.mrb[0].mxu0
    %143 = vmatprep.mubr.f32.mxu0 0.0
    %144 = vmatmul.mubr.f32.gmra.mrb[0].mxu0 %v44
    %v145 = vpop.f32.mrb[0].mxu0
    %v146 = vadd.f32 %v72, %v145
    %v147 = vpop.f32.mrb[0].mxu0
    %148 = vmatprep.mubr.f32.mxu0 0.0
    %149 = vmatmul.mubr.f32.gmra.mrb[0].mxu0 %v45
    %v150 = vpop.f32.mrb[0].mxu0
    %v151 = vadd.f32 %v72, %v150
    %v152 = vpop.f32.mrb[0].mxu0
    %153 = vmatprep.mubr.f32.mxu0 0.0
    %154 = vmatmul.mubr.f32.gmra.mrb[0].mxu0 %v46
    %v155 = vpop.f32.mrb[0].mxu0
    %v156 = vadd.f32 %v72, %v155
    %v157 = vpop.f32.mrb[0].mxu0
    %158 = vmatprep.mubr.f32.mxu0 0.0
    %159 = vmatmul.mubr.f32.gmra.mrb[0].mxu0 %v47
    %v160 = vpop.f32.mrb[0].mxu0
    %v161 = vadd.f32 %v72, %v160
    %v162 = vpop.f32.mrb[0].mxu0
    %163 = vmatprep.mubr.f32.mxu0 0.0
    %164 = vmatmul.mubr.f32.gmra.mrb[0].mxu0 %v48
    %v165 = vpop.f32.mrb[0].mxu0
    %v166 = vadd.f32 %v72, %v165
    %v167 = vpop.f32.mrb[0].mxu0
    %168 = vmatprep.mubr.f32.mxu0 0.0
    %169 = vmatmul.mubr.f32.gmra.mrb[0].mxu0 %v49
    %v170 = vpop.f32.mrb[0].mxu0
    %v171 = vadd.f32 %v72, %v170
    %v172 = vpop.f32.mrb[0].mxu0
    %173 = vmatprep.mubr.f32.mxu0 0.0
    %174 = vmatmul.mubr.f32.gmra.mrb[0].mxu0 %v50
    %v175 = vpop.f32.mrb[0].mxu0
    %v176 = vadd.f32 %v72, %v175
    %v177 = vpop.f32.mrb[0].mxu0
    %178 = vdwg.mxu0
    %179 = vst [vmem:[#allocation7] sm:$0xff] %v141
    %180 = vst [vmem:[#allocation7 + $0x8] sm:$0xff] %v146
    %181 = vst [vmem:[#allocation7 + $0x10] sm:$0xff] %v151
    %182 = vst [vmem:[#allocation7 + $0x18] sm:$0xff] %v156
    %183 = vst [vmem:[#allocation7 + $0x20] sm:$0xff] %v161
    %184 = vst [vmem:[#allocation7 + $0x28] sm:$0xff] %v166
    %185 = vst [vmem:[#allocation7 + $0x30] sm:$0xff] %v171
    %186 = vst [vmem:[#allocation7 + $0x38] sm:$0xff] %v176
    // Predicated region
    $region22: #{tpu_custom_call.1} parent=1 // pred_check
      _
    $region23: #{tpu_custom_call.1} parent=1 // pred_check_branch
      %188 = sbr.rel (0) target = $region25
    $region24: #{tpu_custom_call.1} parent=1 // pred_region
      %s190 = ssub.s32 1024, 1024
      %191 = vsyncadd [#allocation4], %s190
      %s192 = sshll.u32 [#allocation7], 4
      %s193 = int_to_ptr.vmem [resolvable:$true] %s192
      %198 = dma.vmem_to_hbm [thread:$0]  %s193, 1024, %s3, [#allocation4], 128, 128, 8
    $region25: #{tpu_custom_call.1} parent=1 // pred_fallthru
      _
    // Predicated region
    $region26: #{tpu_custom_call.1} parent=1 // pred_check
      _
    $region27: #{tpu_custom_call.1} parent=1 // pred_check_branch
      %200 = sbr.rel (0) target = $region29
    $region28: #{tpu_custom_call.1} parent=1 // pred_region
      %201 = dma.done [#allocation4], 1024
    $region29: #{tpu_custom_call.1} parent=1 // pred_fallthru
      _
    %202 = vsyncpa [#allocation3], 1
    %203 = vsyncpa [#allocation6], 1
    %204 = vsyncpa [#allocation4], 1

</llo_original>
